<compile_context>
chip_gen: v5e
topology: v5e:2x2
jax: 0.10.0
libtpu: 0.0.40
codegen_flags: <defaults>
</compile_context>

<pallas_src>
import functools

import jax
import jax.numpy as jnp
from jax.experimental import pallas as pl
from jax.experimental.pallas import tpu as pltpu

ENTROPY_WEIGHT = 0.05


def _round_up(x, m):
    return ((x + m - 1) // m) * m


def _cdiv(a, b):
    return -(-a // b)


def _loss_kernel(logits_ref, tgt_ref, ce_ref, ent_ref, *,
                 tiles_per_split, tile_b, true_batch, gather_in_kernel):
    s = pl.program_id(0)   # split index (parallel; both TCs on v7x)
    i = pl.program_id(1)   # batch-tile index within split (reduction axis)

    @pl.when(i == 0)
    def _():
        ce_ref[...] = jnp.zeros_like(ce_ref)
        ent_ref[...] = jnp.zeros_like(ent_ref)

    x = logits_ref[...].astype(jnp.float32)          # (TILE_B, C) — C unpadded

    # Numerically stable log-softmax statistics; log_probs never materialized.
    m = jnp.max(x, axis=-1, keepdims=True)           # (TILE_B, 1)
    shifted = x - m
    exps = jnp.exp(shifted)                          # only full-width transcendental
    denom = jnp.sum(exps, axis=-1, keepdims=True)    # (TILE_B, 1)
    log_denom = jnp.log(denom)                       # per-row log only

    if gather_in_kernel:
        # Fallback: in-kernel one-hot gather (for huge vocab, avoid the
        # wrapper-side take_along_axis).
        t = tgt_ref[...]                             # (TILE_B, 1) int32
        class_ids = jax.lax.broadcasted_iota(jnp.int32, x.shape, 1)
        tgt_shifted = jnp.sum(jnp.where(class_ids == t, shifted, 0.0),
                              axis=-1, keepdims=True)
        nll = log_denom - tgt_shifted                # (TILE_B, 1)
    else:
        # tgt_ref holds the per-row target logit (f32), gathered in the wrapper.
        nll = log_denom + m - tgt_ref[...]           # (TILE_B, 1)

    # Entropy: -sum(p log p) = log_denom - sum(exp*shifted)/denom
    # (one full-width multiply + one lane reduce + a per-row divide).
    ent_rows = log_denom - (jnp.sum(exps * shifted, axis=-1, keepdims=True)
                            / denom)

    # Mask padded batch rows out of both sums (ragged batch / row padding).
    row0 = (s * tiles_per_split + i) * tile_b
    rows = row0 + jax.lax.broadcasted_iota(jnp.int32, (tile_b, 1), 0)
    valid = rows < true_batch

    ce_ref[...] += jnp.sum(jnp.where(valid, nll, 0.0))
    ent_ref[...] += jnp.sum(jnp.where(valid, ent_rows, 0.0))


def _vmem_limit_bytes():
    """Generation-aware scoped-VMEM limit (v7x: 32 MiB, v5e/v6e: 64 MiB)."""
    try:
        cap = int(pltpu.get_tpu_info().vmem_capacity_bytes)
    except Exception:
        cap = 64 * 1024 * 1024          # conservative (v7x-like) default
    return max(32 * 1024 * 1024, min(cap // 2, 64 * 1024 * 1024))


def recursive_entropy_loss(logits, targets, entropy_weight=ENTROPY_WEIGHT,
                           tile_b=None, gather_in_kernel=False):
    """Pallas implementation of RecursiveEntropyLoss.forward.

    Args:
      logits:  (batch, num_classes) float array (f32 or bf16 — kept as-is).
      targets: (batch,) int array of class indices.
    Returns:
      (loss, {'cross_entropy': scalar, 'entropy': scalar})  — device scalars.
    """
    batch, num_classes = logits.shape
    itemsize = jnp.dtype(logits.dtype).itemsize
    # Sub-32-bit dtypes pack along sublanes; keep tile rows a multiple of the
    # packing factor so the cast to f32 needs no sublane relayout.
    sub = {4: 8, 2: 16, 1: 32}.get(itemsize, 8)
    c_lane = _round_up(num_classes, 128)   # lane-padded per-row f32 footprint

    vmem_limit = _vmem_limit_bytes()
    if tile_b is None:
        budget = vmem_limit // 2           # headroom for compiler temps
        # 2x double-buffered input tile (input dtype, lane-padded) +
        # ~4 lane-padded f32 temporaries (x, shifted, exps, product).
        per_row = c_lane * (2 * itemsize + 4 * 4) + 64
        tile_b = max(sub, min(8192, budget // per_row))
    tile_b = max(sub, (int(tile_b) // sub) * sub)
    tile_b = min(tile_b, _round_up(batch, sub))

    num_tiles = _cdiv(batch, tile_b)
    # 2 independent partial reductions -> both v7x TensorCores stream half the
    # batch; on v5e/v6e this is just a cheap sequential outer axis.
    n_split = 2 if num_tiles >= 2 else 1
    tiles_per_split = _cdiv(num_tiles, n_split)
    b_pad = n_split * tiles_per_split * tile_b

    if gather_in_kernel:
        tgt_in = targets.astype(jnp.int32).reshape(batch, 1)
    else:
        tgt_in = jnp.take_along_axis(
            logits, targets.astype(jnp.int32)[:, None], axis=-1
        ).astype(jnp.float32)

    # Only pad rows (zeros => finite softmax stats for padded rows; masked out
    # inside the kernel by `valid`).  No class-dim padding at all.
    if b_pad > batch:
        logits_in = jnp.pad(logits, ((0, b_pad - batch), (0, 0)))
        tgt_in = jnp.pad(tgt_in, ((0, b_pad - batch), (0, 0)))
    else:
        logits_in = logits

    kernel = functools.partial(_loss_kernel,
                               tiles_per_split=tiles_per_split,
                               tile_b=tile_b,
                               true_batch=batch,
                               gather_in_kernel=gather_in_kernel)

    cost = pl.CostEstimate(
        flops=6 * b_pad * c_lane,
        transcendentals=b_pad * c_lane + 2 * b_pad,
        bytes_accessed=(b_pad * num_classes * itemsize
                        + b_pad * jnp.dtype(tgt_in.dtype).itemsize
                        + 2 * n_split * 128 * 4),
    )

    ce_parts, ent_parts = pl.pallas_call(
        kernel,
        grid=(n_split, tiles_per_split),
        out_shape=(
            jax.ShapeDtypeStruct((n_split, 1, 128), jnp.float32),
            jax.ShapeDtypeStruct((n_split, 1, 128), jnp.float32),
        ),
        in_specs=[
            # Last block dim == full num_classes (legal even if not a multiple
            # of 128); compiler masks the padded lanes in reductions.
            pl.BlockSpec((tile_b, num_classes),
                         lambda s, i: (s * tiles_per_split + i, 0)),
            pl.BlockSpec((tile_b, 1),
                         lambda s, i: (s * tiles_per_split + i, 0)),
        ],
        out_specs=(
            pl.BlockSpec((1, 1, 128), lambda s, i: (s, 0, 0)),
            pl.BlockSpec((1, 1, 128), lambda s, i: (s, 0, 0)),
        ),
        compiler_params=pltpu.CompilerParams(
            dimension_semantics=("parallel", "arbitrary"),
            vmem_limit_bytes=vmem_limit,
        ),
        cost_estimate=cost,
    )(logits_in, tgt_in)

    ce = jnp.sum(ce_parts[:, 0, 0]) / batch
    avg_entropy = jnp.sum(ent_parts[:, 0, 0]) / batch
    loss = ce + entropy_weight * avg_entropy
    # Device scalars (no .item()/float(): jit-compatible, no host sync).
    return loss, {"cross_entropy": ce, "entropy": avg_entropy}


def _reference(logits, targets, entropy_weight=ENTROPY_WEIGHT):
    """Pure-JAX reference with the exact PyTorch-module math (incl. +1e-9)."""
    logits = logits.astype(jnp.float32)
    log_probs = jax.nn.log_softmax(logits, axis=-1)
    ce = -jnp.mean(jnp.take_along_axis(
        log_probs, targets.astype(jnp.int32)[:, None], axis=-1))
    probs = jax.nn.softmax(logits, axis=-1)
    ent = jnp.mean(-jnp.sum(probs * jnp.log(probs + 1e-9), axis=-1))
    return ce + entropy_weight * ent, ce, ent


if __name__ == "__main__":
    key = jax.random.PRNGKey(0)
    k1, k2, k3, k4 = jax.random.split(key, 4)

    # Case 1: small shapes from the module spec, f32, jitted wrapper.
    batch, num_classes = 8, 16
    logits = jax.random.normal(k1, (batch, num_classes), dtype=jnp.float32)
    targets = jax.random.randint(k2, (batch,), 0, num_classes, dtype=jnp.int32)

    loss_fn = jax.jit(recursive_entropy_loss)
    loss, stats = loss_fn(logits, targets)
    jax.block_until_ready(loss)

    loss_r, ce_r, ent_r = _reference(logits, targets)
    assert jnp.allclose(loss, loss_r, rtol=1e-5, atol=1e-5), (loss, loss_r)
    assert jnp.allclose(stats["cross_entropy"], ce_r, rtol=1e-5, atol=1e-5)
    assert jnp.allclose(stats["entropy"], ent_r, rtol=1e-5, atol=1e-5)

    # Case 2: ragged batch + forced small tile exercises multi-tile streaming,
    # the 2-way split, row masking, and a non-128-multiple class dim with NO
    # class padding; bf16 logits exercise the no-upcast HBM path.
    batch2, classes2 = 50, 200
    logits2 = jax.random.normal(k3, (batch2, classes2),
                                dtype=jnp.float32).astype(jnp.bfloat16)
    targets2 = jax.random.randint(k4, (batch2,), 0, classes2, dtype=jnp.int32)

    loss2, stats2 = recursive_entropy_loss(logits2, targets2, tile_b=16)
    jax.block_until_ready(loss2)

    loss2_r, ce2_r, ent2_r = _reference(logits2.astype(jnp.float32), targets2)
    assert jnp.allclose(loss2, loss2_r, rtol=1e-4, atol=1e-4), (loss2, loss2_r)
    assert jnp.allclose(stats2["cross_entropy"], ce2_r, rtol=1e-4, atol=1e-4)
    assert jnp.allclose(stats2["entropy"], ent2_r, rtol=1e-4, atol=1e-4)

    # Case 3: in-kernel one-hot fallback path (large-vocab option).
    loss3, stats3 = recursive_entropy_loss(logits2, targets2, tile_b=16,
                                           gather_in_kernel=True)
    jax.block_until_ready(loss3)
    assert jnp.allclose(loss3, loss2_r, rtol=1e-4, atol=1e-4), (loss3, loss2_r)
    assert jnp.allclose(stats3["cross_entropy"], ce2_r, rtol=1e-4, atol=1e-4)
    assert jnp.allclose(stats3["entropy"], ent2_r, rtol=1e-4, atol=1e-4)

    print("KERNEL_OK")
</pallas_src>

<mosaic_0001>
module attributes {stable_mosaic.version = 11 : i64} {
  func.func @_loss_kernel(%arg0: i32, %arg1: i32, %arg2: memref<8x16xf32, #tpu.memory_space<vmem>>, %arg3: memref<8x1xf32, #tpu.memory_space<vmem>>, %arg4: memref<1x1x128xf32, #tpu.memory_space<vmem>>, %arg5: memref<1x1x128xf32, #tpu.memory_space<vmem>>) attributes {dimension_semantics = [#tpu.dimension_semantics<parallel>, #tpu.dimension_semantics<arbitrary>], iteration_bounds = array<i64: 1, 1>, scalar_prefetch = 0 : i64, scratch_operands = 0 : i64, tpu.core_type = #tpu.core_type<tc>, window_params = [{transform_indices = @transform_0, window_bounds = array<i64: 8, 16>}, {transform_indices = @transform_1, window_bounds = array<i64: 8, 1>}, {transform_indices = @transform_2, window_bounds = array<i64: 1, 1, 128>}, {transform_indices = @transform_3, window_bounds = array<i64: 1, 1, 128>}]} {
    %c0_i32 = arith.constant 0 : i32
    %0 = arith.cmpi eq, %arg1, %c0_i32 : i32
    %1 = arith.extui %0 : i1 to i32
    %c0_i32_0 = arith.constant 0 : i32
    %2 = arith.cmpi ne, %1, %c0_i32_0 : i32
    scf.if %2 {
      %cst_23 = arith.constant 0.000000e+00 : f32
      %48 = vector.broadcast %cst_23 : f32 to vector<1x1x128xf32>
      %c0_24 = arith.constant 0 : index
      %c0_25 = arith.constant 0 : index
      %c0_26 = arith.constant 0 : index
      %49 = vector.load %arg4[%c0_24, %c0_25, %c0_26] : memref<1x1x128xf32, #tpu.memory_space<vmem>>, vector<1x1x128xf32>
      tpu.vector_store %arg4[%c0_24, %c0_25, %c0_26], %48 {strides = array<i32>} : memref<1x1x128xf32, #tpu.memory_space<vmem>>, vector<1x1x128xf32>,
      %cst_27 = arith.constant 0.000000e+00 : f32
      %50 = vector.broadcast %cst_27 : f32 to vector<1x1x128xf32>
      %c0_28 = arith.constant 0 : index
      %c0_29 = arith.constant 0 : index
      %c0_30 = arith.constant 0 : index
      %51 = vector.load %arg5[%c0_28, %c0_29, %c0_30] : memref<1x1x128xf32, #tpu.memory_space<vmem>>, vector<1x1x128xf32>
      tpu.vector_store %arg5[%c0_28, %c0_29, %c0_30], %50 {strides = array<i32>} : memref<1x1x128xf32, #tpu.memory_space<vmem>>, vector<1x1x128xf32>,
    } else {
    }
    %c0 = arith.constant 0 : index
    %c0_1 = arith.constant 0 : index
    %3 = vector.load %arg2[%c0, %c0_1] : memref<8x16xf32, #tpu.memory_space<vmem>>, vector<8x16xf32>
    %cst = arith.constant dense<0xFF800000> : vector<8xf32>
    %4 = vector.multi_reduction <maximumf>, %3, %cst [1] : vector<8x16xf32> to vector<8xf32>
    %5 = vector.shape_cast %4 : vector<8xf32> to vector<8x1xf32>
    %6 = vector.broadcast %5 : vector<8x1xf32> to vector<8x16xf32>
    %7 = arith.subf %3, %6 : vector<8x16xf32>
    %8 = math.exp %7 : vector<8x16xf32>
    %cst_2 = arith.constant dense<0.000000e+00> : vector<8xf32>
    %9 = vector.multi_reduction <add>, %8, %cst_2 [1] : vector<8x16xf32> to vector<8xf32>
    %10 = vector.shape_cast %9 : vector<8xf32> to vector<8x1xf32>
    %11 = math.log %10 : vector<8x1xf32>
    %12 = arith.addf %11, %5 : vector<8x1xf32>
    %c0_3 = arith.constant 0 : index
    %c0_4 = arith.constant 0 : index
    %13 = vector.load %arg3[%c0_3, %c0_4] : memref<8x1xf32, #tpu.memory_space<vmem>>, vector<8x1xf32>
    %14 = arith.subf %12, %13 : vector<8x1xf32>
    %15 = arith.mulf %8, %7 : vector<8x16xf32>
    %cst_5 = arith.constant dense<0.000000e+00> : vector<8xf32>
    %16 = vector.multi_reduction <add>, %15, %cst_5 [1] : vector<8x16xf32> to vector<8xf32>
    %17 = vector.shape_cast %16 : vector<8xf32> to vector<8x1xf32>
    %18 = arith.divf %17, %10 : vector<8x1xf32>
    %19 = arith.subf %11, %18 : vector<8x1xf32>
    %c1_i32 = arith.constant 1 : i32
    %20 = arith.muli %arg0, %c1_i32 : i32
    %21 = arith.addi %20, %arg1 : i32
    %c8_i32 = arith.constant 8 : i32
    %22 = arith.muli %21, %c8_i32 : i32
    %23 = tpu.iota {dimensions = array<i32: 0>} : vector<8x1xi32>
    %24 = vector.broadcast %22 : i32 to vector<8x1xi32>
    %25 = arith.addi %24, %23 : vector<8x1xi32>
    %c8_i32_6 = arith.constant 8 : i32
    %26 = vector.broadcast %c8_i32_6 : i32 to vector<8x1xi32>
    %27 = arith.cmpi slt, %25, %26 : vector<8x1xi32>
    %c0_7 = arith.constant 0 : index
    %c0_8 = arith.constant 0 : index
    %c0_9 = arith.constant 0 : index
    %28 = vector.load %arg4[%c0_7, %c0_8, %c0_9] : memref<1x1x128xf32, #tpu.memory_space<vmem>>, vector<1x1x128xf32>
    %cst_10 = arith.constant 0.000000e+00 : f32
    %29 = vector.broadcast %cst_10 : f32 to vector<8x1xf32>
    %30 = arith.select %27, %14, %29 : vector<8x1xi1>, vector<8x1xf32>
    %31 = vector.shape_cast %30 : vector<8x1xf32> to vector<1x8x1xf32>
    %cst_11 = arith.constant dense<0.000000e+00> : vector<1xf32>
    %32 = vector.multi_reduction <add>, %31, %cst_11 [1, 2] : vector<1x8x1xf32> to vector<1xf32>
    %33 = vector.shape_cast %32 : vector<1xf32> to vector<1x1x1xf32>
    %34 = vector.extract %33[0, 0, 0] : f32 from vector<1x1x1xf32>
    %35 = vector.broadcast %34 : f32 to vector<1x1x128xf32>
    %36 = arith.addf %28, %35 : vector<1x1x128xf32>
    %c0_12 = arith.constant 0 : index
    %c0_13 = arith.constant 0 : index
    %c0_14 = arith.constant 0 : index
    %37 = vector.load %arg4[%c0_12, %c0_13, %c0_14] : memref<1x1x128xf32, #tpu.memory_space<vmem>>, vector<1x1x128xf32>
    tpu.vector_store %arg4[%c0_12, %c0_13, %c0_14], %36 {strides = array<i32>} : memref<1x1x128xf32, #tpu.memory_space<vmem>>, vector<1x1x128xf32>,
    %c0_15 = arith.constant 0 : index
    %c0_16 = arith.constant 0 : index
    %c0_17 = arith.constant 0 : index
    %38 = vector.load %arg5[%c0_15, %c0_16, %c0_17] : memref<1x1x128xf32, #tpu.memory_space<vmem>>, vector<1x1x128xf32>
    %cst_18 = arith.constant 0.000000e+00 : f32
    %39 = vector.broadcast %cst_18 : f32 to vector<8x1xf32>
    %40 = arith.select %27, %19, %39 : vector<8x1xi1>, vector<8x1xf32>
    %41 = vector.shape_cast %40 : vector<8x1xf32> to vector<1x8x1xf32>
    %cst_19 = arith.constant dense<0.000000e+00> : vector<1xf32>
    %42 = vector.multi_reduction <add>, %41, %cst_19 [1, 2] : vector<1x8x1xf32> to vector<1xf32>
    %43 = vector.shape_cast %42 : vector<1xf32> to vector<1x1x1xf32>
    %44 = vector.extract %43[0, 0, 0] : f32 from vector<1x1x1xf32>
    %45 = vector.broadcast %44 : f32 to vector<1x1x128xf32>
    %46 = arith.addf %38, %45 : vector<1x1x128xf32>
    %c0_20 = arith.constant 0 : index
    %c0_21 = arith.constant 0 : index
    %c0_22 = arith.constant 0 : index
    %47 = vector.load %arg5[%c0_20, %c0_21, %c0_22] : memref<1x1x128xf32, #tpu.memory_space<vmem>>, vector<1x1x128xf32>
    tpu.vector_store %arg5[%c0_20, %c0_21, %c0_22], %46 {strides = array<i32>} : memref<1x1x128xf32, #tpu.memory_space<vmem>>, vector<1x1x128xf32>,
    return
  }
  func.func @transform_0(%arg0: i32, %arg1: i32) -> (i32, i32) {
    %c1_i32 = arith.constant 1 : i32
    %0 = arith.muli %arg0, %c1_i32 : i32
    %1 = arith.addi %0, %arg1 : i32
    %c0_i32 = arith.constant 0 : i32
    %c0_i32_0 = arith.constant 0 : i32
    return %1, %c0_i32 : i32, i32
  }
  func.func @transform_1(%arg0: i32, %arg1: i32) -> (i32, i32) {
    %c1_i32 = arith.constant 1 : i32
    %0 = arith.muli %arg0, %c1_i32 : i32
    %1 = arith.addi %0, %arg1 : i32
    %c0_i32 = arith.constant 0 : i32
    %c0_i32_0 = arith.constant 0 : i32
    return %1, %c0_i32 : i32, i32
  }
  func.func @transform_2(%arg0: i32, %arg1: i32) -> (i32, i32, i32) {
    %c0_i32 = arith.constant 0 : i32
    %c0_i32_0 = arith.constant 0 : i32
    %c0_i32_1 = arith.constant 0 : i32
    return %arg0, %c0_i32, %c0_i32_0 : i32, i32, i32
  }
  func.func @transform_3(%arg0: i32, %arg1: i32) -> (i32, i32, i32) {
    %c0_i32 = arith.constant 0 : i32
    %c0_i32_0 = arith.constant 0 : i32
    %c0_i32_1 = arith.constant 0 : i32
    return %arg0, %c0_i32, %c0_i32_0 : i32, i32, i32
  }
}

</mosaic_0001>

<llo_original>
// kernel: recursive_entropy_loss.1
$region0: #{recursive_entropy_loss.1}
  #allocation0 [shape = 'u32[]', space=smem, size = 0x4, offset = 0x4, fixed_abs, tag = 'smem constant byte address 0x4 - core index']
  #allocation1 [shape = 'u32[72,128]{1,0:T(1,128)}', space=vmem, size = 0x9000, scoped, tag = 'internal scratch']
  %s0 = inlined_call_operand.vmem [shape: f32[8,16], index: 0, kind: input, shape index: {}]
  %s1 = inlined_call_operand.vmem [shape: f32[8,1], index: 1, kind: input, shape index: {}]
  %s2 = inlined_call_operand.vmem [shape: f32[1,1,128], index: 2, kind: output, shape index: {0}]
  %s3 = inlined_call_operand.vmem [shape: f32[1,1,128], index: 3, kind: output, shape index: {1}]
  %4 = xla_tuple %s2, %s3
  %s5 = sld [smem:[#allocation0]]
  $region30: #{recursive_entropy_loss.1} parent=0
    _
  %s7 = ssub.s32 1, %s5
  %s8 = scalar_select 0, %s7, %s5
  // Predicated region
  $region2: #{recursive_entropy_loss.1} parent=0 // pred_check
    _
  $region3: #{recursive_entropy_loss.1} parent=0 // pred_check_branch
    %10 = sbr.rel (0) target = $region5
  $region4: #{recursive_entropy_loss.1} parent=0 // pred_region
    %s11 = sadd.s32 0, 0
    %p12 = scmp.lt.s32.totalorder %s11, 0
    %s13 = scalar_select %p12, %s11, 0
    %s14 = smul.addr %s13, 8
    %s15 = scalar_lea.vmem %s0, %s14
    %s16 = sadd.s32 0, 0
  $region5: #{recursive_entropy_loss.1} parent=0 // pred_fallthru
    _
  // Predicated region
  $region6: #{recursive_entropy_loss.1} parent=0 // pred_check
    _
  $region7: #{recursive_entropy_loss.1} parent=0 // pred_check_branch
    %18 = sbr.rel (0) target = $region9
  $region8: #{recursive_entropy_loss.1} parent=0 // pred_region
    %s19 = sadd.s32 0, 0
    %p20 = scmp.lt.s32.totalorder %s19, 0
    %s21 = scalar_select %p20, %s19, 0
    %s22 = smul.addr %s21, 8
    %s23 = scalar_lea.vmem %s1, %s22
    %s24 = sadd.s32 0, 0
  $region9: #{recursive_entropy_loss.1} parent=0 // pred_fallthru
    _
  %s25 = sadd.s32 0, 0
  %p26 = scmp.lt.s32.totalorder %s25, 0
  %s27 = scalar_select %p26, %s25, 0
  %s28 = smul.addr %s27, 8
  %s29 = scalar_lea.vmem %s0, %s28
  %s30 = sadd.s32 0, 0
  %p31 = scmp.lt.s32.totalorder %s30, 0
  %s32 = scalar_select %p31, %s30, 0
  %s33 = smul.addr %s32, 8
  %s34 = scalar_lea.vmem %s1, %s33
  %s35 = sadd.s32 0, 0
  %p36 = scmp.lt.s32.totalorder %s35, 0
  %s37 = scalar_select %p36, %s35, 0
  %s38 = smul.addr %s37, 8
  %s39 = scalar_lea.vmem %s0, %s38
  %s40 = sadd.s32 0, 0
  %s41 = sadd.s32 0, 0
  %p42 = scmp.lt.s32.totalorder %s41, 0
  %s43 = scalar_select %p42, %s41, 0
  %s44 = smul.addr %s43, 8
  %s45 = scalar_lea.vmem %s1, %s44
  %s46 = sadd.s32 0, 0
  %p47 = scmp.eq.s32.totalorder 0, 0
  // Predicated region
  $region10: #{recursive_entropy_loss.1} parent=0 // pred_check
    %p48 = pneg %p47
  $region11: #{recursive_entropy_loss.1} parent=0 // pred_check_branch
    %50 = sbr.rel (%p48) target = $region13
  $region12: #{recursive_entropy_loss.1} parent=0 // pred_region
    %51 = vst [vmem:[%s2] sm:$0x1] 0.0
    %52 = vst [vmem:[%s3] sm:$0x1] 0.0
  $region13: #{recursive_entropy_loss.1} parent=0 // pred_fallthru
    _
  %v53 = vld [vmem:[%s39] sm:$0xff]
  %vm54 = vcmask 130048
  %v55 = vsel %vm54, %v53, -inf
  %56 = vmax.xlane.f32.xlu0 %v55
  %v57 = vpop.xlane.xlu0 %56
  %v58 = vsub.f32 %v53, %v57
  %v59 = vmul.f32 %v58, 1.442695
  %v60 = vpow.pop %v59
  %v61 = vsel %vm54, %v60, 0.0
  %62 = vadd.xlane.f32.xlu0 %v61
  %v63 = vpop.xlane.xlu0 %62
  %v64 = vlog2.pop %v63
  %v65 = vmul.f32 %v64, 0.6931472
  %v66 = vadd.f32 %v65, %v57
  %v67 = vld [vmem:[%s45] sm:$0xff]
  %v68 = vsub.f32 %v66, %v67
  %v69 = vmul.f32 %v60, %v58
  %v70 = vsel %vm54, %v69, 0.0
  %71 = vadd.xlane.f32.xlu0 %v70
  %v72 = vpop.xlane.xlu0 %71
  %v73 = vrcp.pop %v63
  %v74 = vmul.f32 %v63, %v73
  %v75 = vsub.f32 1.0, %v74
  %v76 = vmul.f32 %v73, %v75
  %v77 = vadd.f32 %v73, %v76
  %vm78 = vweird.f32 %v63
  %vm79 = vweird.f32 %v73
  %vm80 = vmor %vm78, %vm79
  %v81 = vsel %vm80, %v73, %v77
  %v82 = vand.u32 2147483647, %v63
  %vm83 = vcmp.eq.f32.partialorder %v82, 8.507059e+37
  %v84 = vand.u32 %v63, 2147483648
  %v85 = vor.u32 1.1754944e-38, %v84
  %v86 = vsel %vm83, %v85, %v81
  %v87 = vmul.f32 %v72, %v86
  %v88 = vsub.f32 %v65, %v87
  %s89 = sadd.s32 0, 0
  %s90 = smul.u32 %s89, 8
  %v91 = vlaneseq
  %v92 = vshrl.u32 %v91, 7
  %v93 = vstv %s90
  %v94 = vadd.s32 %v93, %v92
  %vm95 = vcmp.lt.s32.totalorder %v94, 8
  %v96 = vld [vmem:[%s2] sm:$0x1]
  %v97 = vsel %vm95, %v68, 0.0
  %vm98 = vcmask 7168
  %v99 = vsel %vm98, %v97, 0.0
  %100 = vadd.xlane.f32.xlu0 %v99
  %v101 = vpop.xlane.xlu0 %100
  %v102 = vrot.slane %v101, 4
  %v103 = vadd.f32 %v101, %v102
  %v104 = vrot.slane %v103, 2
  %v105 = vadd.f32 %v103, %v104
  %v106 = vrot.slane %v105, 1
  %v107 = vadd.f32 %v105, %v106
  %s108 = vtos %v107
  %v109 = vstv %s108
  %v110 = vadd.f32 %v96, %v109
  %111 = vst [vmem:[%s2] sm:$0x1] %v110
  %v112 = vld [vmem:[%s3] sm:$0x1]
  %v113 = vsel %vm95, %v88, 0.0
  %v114 = vsel %vm98, %v113, 0.0
  %115 = vadd.xlane.f32.xlu0 %v114
  %v116 = vpop.xlane.xlu0 %115
  %v117 = vrot.slane %v116, 4
  %v118 = vadd.f32 %v116, %v117
  %v119 = vrot.slane %v118, 2
  %v120 = vadd.f32 %v118, %v119
  %v121 = vrot.slane %v120, 1
  %v122 = vadd.f32 %v120, %v121
  %s123 = vtos %v122
  %v124 = vstv %s123
  %v125 = vadd.f32 %v112, %v124
  %126 = vst [vmem:[%s3] sm:$0x1] %v125
  // Predicated region
  $region14: #{recursive_entropy_loss.1} parent=0 // pred_check
    _
  $region15: #{recursive_entropy_loss.1} parent=0 // pred_check_branch
    %128 = sbr.rel (0) target = $region17
  $region16: #{recursive_entropy_loss.1} parent=0 // pred_region
    _
  $region17: #{recursive_entropy_loss.1} parent=0 // pred_fallthru
    _
  // Predicated region
  $region18: #{recursive_entropy_loss.1} parent=0 // pred_check
    _
  $region19: #{recursive_entropy_loss.1} parent=0 // pred_check_branch
    %130 = sbr.rel (0) target = $region21
  $region20: #{recursive_entropy_loss.1} parent=0 // pred_region
    _
  $region21: #{recursive_entropy_loss.1} parent=0 // pred_fallthru
    _
  // Predicated region
  $region22: #{recursive_entropy_loss.1} parent=0 // pred_check
    _
  $region23: #{recursive_entropy_loss.1} parent=0 // pred_check_branch
    %132 = sbr.rel (0) target = $region25
  $region24: #{recursive_entropy_loss.1} parent=0 // pred_region
    _
  $region25: #{recursive_entropy_loss.1} parent=0 // pred_fallthru
    _
  // Predicated region
  $region26: #{recursive_entropy_loss.1} parent=0 // pred_check
    _
  $region27: #{recursive_entropy_loss.1} parent=0 // pred_check_branch
    %134 = sbr.rel (0) target = $region29
  $region28: #{recursive_entropy_loss.1} parent=0 // pred_region
    _
  $region29: #{recursive_entropy_loss.1} parent=0 // pred_fallthru
    _

</llo_original>
